<compile_context>
chip_gen: v7x
topology: tpu7x:2x2x1
jax: 0.10.0
libtpu: 0.0.40
codegen_flags: <defaults>
</compile_context>

<pallas_src>
import functools

import jax
import jax.numpy as jnp
from jax.experimental import pallas as pl
from jax.experimental.pallas import tpu as pltpu


def _fused_linear_kernel(w_ref, b_ref, x_ref, o_ref):
    """out = (W[:, :K] + W[:, K:]) @ x + b, computed on the VPU.

    w_ref: (6, 24)      raw Linear weight (whole, VMEM-resident across the grid)
    b_ref: (6, 1)       bias
    x_ref: (12, TILE_B) input tile, batch on the lane axis
    o_ref: (6, TILE_B)  output tile, already in the final (6, B) orientation
    """
    k_half = x_ref.shape[0]                        # 12
    w = w_ref[...]                                 # (6, 24)
    # stack((x, x), 1).flatten(1) @ W.T == x_flat @ (W[:, :12] + W[:, 12:]).T
    w_eff = w[:, :k_half] + w[:, k_half:]          # (6, 12) in-kernel fold
    x = x_ref[...]                                 # (12, TILE_B)

    # MXU skipped (K=12, N=6 would be <1% utilized): unrolled outer-product
    # accumulate on the VPU -> 12 broadcast-multiply-adds on (6, TILE_B) vregs.
    acc = w_eff[:, 0:1] * x[0:1, :] + b_ref[...]   # (6, TILE_B)
    for k in range(1, k_half):
        acc = acc + w_eff[:, k:k + 1] * x[k:k + 1, :]
    o_ref[...] = acc.astype(o_ref.dtype)


@functools.partial(jax.jit, static_argnames=("tile_b",))
def model_forward(x, weight, bias, *, tile_b=512):
    """x: (B, 4, 3) f32; weight: (6, 24); bias: (6,). Returns (6, B) f32."""
    B = x.shape[0]
    feat = x.shape[1] * x.shape[2]                 # 12 (duplicated to 24 by stack)
    out_f = weight.shape[0]                        # 6

    # Batch on the lane axis -> lane-dense vregs and long contiguous DMA rows.
    x_t = x.reshape(B, feat).T                     # (12, B)
    b2 = bias.reshape(out_f, 1)                    # (6, 1), free bitcast

    tb = min(tile_b, B)                            # >=512-wide tiles once B scales
    grid = (pl.cdiv(B, tb),)

    y = pl.pallas_call(
        _fused_linear_kernel,
        out_shape=jax.ShapeDtypeStruct((out_f, B), jnp.float32),
        grid_spec=pltpu.PrefetchScalarGridSpec(
            num_scalar_prefetch=0,
            grid=grid,
            in_specs=[
                pl.BlockSpec((out_f, weight.shape[1]), lambda i: (0, 0)),  # W resident
                pl.BlockSpec((out_f, 1), lambda i: (0, 0)),                # bias resident
                pl.BlockSpec((feat, tb), lambda i: (0, i)),                # stream x over B
            ],
            out_specs=pl.BlockSpec((out_f, tb), lambda i: (0, i)),
        ),
        compiler_params=pltpu.CompilerParams(
            dimension_semantics=("parallel",)),
    )(weight, b2, x_t)

    # The kernel already emits the transpose(1, 0) orientation; flatten(1) on a
    # 2-D tensor is a no-op.
    return y


if __name__ == "__main__":
    key = jax.random.PRNGKey(0)
    kx, kw, kb = jax.random.split(key, 3)

    # Linear(24, 6) implies 12 input features before the stack((x, x))
    # duplication; (B, 4, 3) gives 4*3 = 12, consistent with the module.
    B = 8
    x = jax.random.normal(kx, (B, 4, 3), dtype=jnp.float32)

    # Deterministic Linear(24, 6) parameters (PyTorch-style uniform init).
    in_features, out_features = 24, 6
    bound = 1.0 / (in_features ** 0.5)
    weight = jax.random.uniform(kw, (out_features, in_features),
                                minval=-bound, maxval=bound, dtype=jnp.float32)
    bias = jax.random.uniform(kb, (out_features,),
                              minval=-bound, maxval=bound, dtype=jnp.float32)

    out = model_forward(x, weight, bias)
    jax.block_until_ready(out)

    # Reference in plain JAX (original, un-folded formulation).
    x_flat = x.reshape(B, -1)
    ref = (jnp.concatenate([x_flat, x_flat], axis=-1) @ weight.T + bias).T

    assert out.shape == (out_features, B), out.shape
    assert jnp.allclose(out, ref, atol=1e-5, rtol=1e-5)
    print("KERNEL_OK")
</pallas_src>

<mosaic_0001>
module attributes {stable_mosaic.version = 11 : i64} {
  func.func @_fused_linear_kernel(%arg0: i32, %arg1: memref<6x24xf32, #tpu.memory_space<vmem>>, %arg2: memref<6x1xf32, #tpu.memory_space<vmem>>, %arg3: memref<12x8xf32, #tpu.memory_space<vmem>>, %arg4: memref<6x8xf32, #tpu.memory_space<vmem>>) attributes {dimension_semantics = [#tpu.dimension_semantics<parallel>], iteration_bounds = array<i64: 1>, scalar_prefetch = 0 : i64, scratch_operands = 0 : i64, tpu.core_type = #tpu.core_type<tc>, window_params = [{pipeline_mode = #tpu.pipeline_mode<synchronous>, transform_indices = @transform_0, window_bounds = array<i64: 6, 24>}, {pipeline_mode = #tpu.pipeline_mode<synchronous>, transform_indices = @transform_1, window_bounds = array<i64: 6, 1>}, {transform_indices = @transform_2, window_bounds = array<i64: 12, 8>}, {transform_indices = @transform_3, window_bounds = array<i64: 6, 8>}]} {
    %c0 = arith.constant 0 : index
    %c0_0 = arith.constant 0 : index
    %0 = vector.load %arg1[%c0, %c0_0] : memref<6x24xf32, #tpu.memory_space<vmem>>, vector<6x24xf32>
    %1 = vector.extract_strided_slice %0 {offsets = [0, 0], sizes = [6, 12], strides = [1, 1]} : vector<6x24xf32> to vector<6x12xf32>
    %2 = vector.extract_strided_slice %0 {offsets = [0, 12], sizes = [6, 12], strides = [1, 1]} : vector<6x24xf32> to vector<6x12xf32>
    %3 = arith.addf %1, %2 : vector<6x12xf32>
    %c0_1 = arith.constant 0 : index
    %c0_2 = arith.constant 0 : index
    %4 = vector.load %arg3[%c0_1, %c0_2] : memref<12x8xf32, #tpu.memory_space<vmem>>, vector<12x8xf32>
    %5 = vector.extract_strided_slice %3 {offsets = [0, 0], sizes = [6, 1], strides = [1, 1]} : vector<6x12xf32> to vector<6x1xf32>
    %6 = vector.extract_strided_slice %4 {offsets = [0, 0], sizes = [1, 8], strides = [1, 1]} : vector<12x8xf32> to vector<1x8xf32>
    %7 = vector.broadcast %5 : vector<6x1xf32> to vector<6x8xf32>
    %8 = vector.broadcast %6 : vector<1x8xf32> to vector<6x8xf32>
    %9 = arith.mulf %7, %8 : vector<6x8xf32>
    %c0_3 = arith.constant 0 : index
    %c0_4 = arith.constant 0 : index
    %10 = vector.load %arg2[%c0_3, %c0_4] : memref<6x1xf32, #tpu.memory_space<vmem>>, vector<6x1xf32>
    %11 = vector.broadcast %10 : vector<6x1xf32> to vector<6x8xf32>
    %12 = arith.addf %9, %11 : vector<6x8xf32>
    %13 = vector.extract_strided_slice %3 {offsets = [0, 1], sizes = [6, 1], strides = [1, 1]} : vector<6x12xf32> to vector<6x1xf32>
    %14 = vector.extract_strided_slice %4 {offsets = [1, 0], sizes = [1, 8], strides = [1, 1]} : vector<12x8xf32> to vector<1x8xf32>
    %15 = vector.broadcast %13 : vector<6x1xf32> to vector<6x8xf32>
    %16 = vector.broadcast %14 : vector<1x8xf32> to vector<6x8xf32>
    %17 = arith.mulf %15, %16 : vector<6x8xf32>
    %18 = arith.addf %12, %17 : vector<6x8xf32>
    %19 = vector.extract_strided_slice %3 {offsets = [0, 2], sizes = [6, 1], strides = [1, 1]} : vector<6x12xf32> to vector<6x1xf32>
    %20 = vector.extract_strided_slice %4 {offsets = [2, 0], sizes = [1, 8], strides = [1, 1]} : vector<12x8xf32> to vector<1x8xf32>
    %21 = vector.broadcast %19 : vector<6x1xf32> to vector<6x8xf32>
    %22 = vector.broadcast %20 : vector<1x8xf32> to vector<6x8xf32>
    %23 = arith.mulf %21, %22 : vector<6x8xf32>
    %24 = arith.addf %18, %23 : vector<6x8xf32>
    %25 = vector.extract_strided_slice %3 {offsets = [0, 3], sizes = [6, 1], strides = [1, 1]} : vector<6x12xf32> to vector<6x1xf32>
    %26 = vector.extract_strided_slice %4 {offsets = [3, 0], sizes = [1, 8], strides = [1, 1]} : vector<12x8xf32> to vector<1x8xf32>
    %27 = vector.broadcast %25 : vector<6x1xf32> to vector<6x8xf32>
    %28 = vector.broadcast %26 : vector<1x8xf32> to vector<6x8xf32>
    %29 = arith.mulf %27, %28 : vector<6x8xf32>
    %30 = arith.addf %24, %29 : vector<6x8xf32>
    %31 = vector.extract_strided_slice %3 {offsets = [0, 4], sizes = [6, 1], strides = [1, 1]} : vector<6x12xf32> to vector<6x1xf32>
    %32 = vector.extract_strided_slice %4 {offsets = [4, 0], sizes = [1, 8], strides = [1, 1]} : vector<12x8xf32> to vector<1x8xf32>
    %33 = vector.broadcast %31 : vector<6x1xf32> to vector<6x8xf32>
    %34 = vector.broadcast %32 : vector<1x8xf32> to vector<6x8xf32>
    %35 = arith.mulf %33, %34 : vector<6x8xf32>
    %36 = arith.addf %30, %35 : vector<6x8xf32>
    %37 = vector.extract_strided_slice %3 {offsets = [0, 5], sizes = [6, 1], strides = [1, 1]} : vector<6x12xf32> to vector<6x1xf32>
    %38 = vector.extract_strided_slice %4 {offsets = [5, 0], sizes = [1, 8], strides = [1, 1]} : vector<12x8xf32> to vector<1x8xf32>
    %39 = vector.broadcast %37 : vector<6x1xf32> to vector<6x8xf32>
    %40 = vector.broadcast %38 : vector<1x8xf32> to vector<6x8xf32>
    %41 = arith.mulf %39, %40 : vector<6x8xf32>
    %42 = arith.addf %36, %41 : vector<6x8xf32>
    %43 = vector.extract_strided_slice %3 {offsets = [0, 6], sizes = [6, 1], strides = [1, 1]} : vector<6x12xf32> to vector<6x1xf32>
    %44 = vector.extract_strided_slice %4 {offsets = [6, 0], sizes = [1, 8], strides = [1, 1]} : vector<12x8xf32> to vector<1x8xf32>
    %45 = vector.broadcast %43 : vector<6x1xf32> to vector<6x8xf32>
    %46 = vector.broadcast %44 : vector<1x8xf32> to vector<6x8xf32>
    %47 = arith.mulf %45, %46 : vector<6x8xf32>
    %48 = arith.addf %42, %47 : vector<6x8xf32>
    %49 = vector.extract_strided_slice %3 {offsets = [0, 7], sizes = [6, 1], strides = [1, 1]} : vector<6x12xf32> to vector<6x1xf32>
    %50 = vector.extract_strided_slice %4 {offsets = [7, 0], sizes = [1, 8], strides = [1, 1]} : vector<12x8xf32> to vector<1x8xf32>
    %51 = vector.broadcast %49 : vector<6x1xf32> to vector<6x8xf32>
    %52 = vector.broadcast %50 : vector<1x8xf32> to vector<6x8xf32>
    %53 = arith.mulf %51, %52 : vector<6x8xf32>
    %54 = arith.addf %48, %53 : vector<6x8xf32>
    %55 = vector.extract_strided_slice %3 {offsets = [0, 8], sizes = [6, 1], strides = [1, 1]} : vector<6x12xf32> to vector<6x1xf32>
    %56 = vector.extract_strided_slice %4 {offsets = [8, 0], sizes = [1, 8], strides = [1, 1]} : vector<12x8xf32> to vector<1x8xf32>
    %57 = vector.broadcast %55 : vector<6x1xf32> to vector<6x8xf32>
    %58 = vector.broadcast %56 : vector<1x8xf32> to vector<6x8xf32>
    %59 = arith.mulf %57, %58 : vector<6x8xf32>
    %60 = arith.addf %54, %59 : vector<6x8xf32>
    %61 = vector.extract_strided_slice %3 {offsets = [0, 9], sizes = [6, 1], strides = [1, 1]} : vector<6x12xf32> to vector<6x1xf32>
    %62 = vector.extract_strided_slice %4 {offsets = [9, 0], sizes = [1, 8], strides = [1, 1]} : vector<12x8xf32> to vector<1x8xf32>
    %63 = vector.broadcast %61 : vector<6x1xf32> to vector<6x8xf32>
    %64 = vector.broadcast %62 : vector<1x8xf32> to vector<6x8xf32>
    %65 = arith.mulf %63, %64 : vector<6x8xf32>
    %66 = arith.addf %60, %65 : vector<6x8xf32>
    %67 = vector.extract_strided_slice %3 {offsets = [0, 10], sizes = [6, 1], strides = [1, 1]} : vector<6x12xf32> to vector<6x1xf32>
    %68 = vector.extract_strided_slice %4 {offsets = [10, 0], sizes = [1, 8], strides = [1, 1]} : vector<12x8xf32> to vector<1x8xf32>
    %69 = vector.broadcast %67 : vector<6x1xf32> to vector<6x8xf32>
    %70 = vector.broadcast %68 : vector<1x8xf32> to vector<6x8xf32>
    %71 = arith.mulf %69, %70 : vector<6x8xf32>
    %72 = arith.addf %66, %71 : vector<6x8xf32>
    %73 = vector.extract_strided_slice %3 {offsets = [0, 11], sizes = [6, 1], strides = [1, 1]} : vector<6x12xf32> to vector<6x1xf32>
    %74 = vector.extract_strided_slice %4 {offsets = [11, 0], sizes = [1, 8], strides = [1, 1]} : vector<12x8xf32> to vector<1x8xf32>
    %75 = vector.broadcast %73 : vector<6x1xf32> to vector<6x8xf32>
    %76 = vector.broadcast %74 : vector<1x8xf32> to vector<6x8xf32>
    %77 = arith.mulf %75, %76 : vector<6x8xf32>
    %78 = arith.addf %72, %77 : vector<6x8xf32>
    %c0_5 = arith.constant 0 : index
    %c0_6 = arith.constant 0 : index
    %79 = vector.load %arg4[%c0_5, %c0_6] : memref<6x8xf32, #tpu.memory_space<vmem>>, vector<6x8xf32>
    tpu.vector_store %arg4[%c0_5, %c0_6], %78 {strides = array<i32>} : memref<6x8xf32, #tpu.memory_space<vmem>>, vector<6x8xf32>,
    return
  }
  func.func @transform_0(%arg0: i32) -> (i32, i32) {
    %c0_i32 = arith.constant 0 : i32
    %c0_i32_0 = arith.constant 0 : i32
    %c0_i32_1 = arith.constant 0 : i32
    return %c0_i32, %c0_i32_0 : i32, i32
  }
  func.func @transform_1(%arg0: i32) -> (i32, i32) {
    %c0_i32 = arith.constant 0 : i32
    %c0_i32_0 = arith.constant 0 : i32
    %c0_i32_1 = arith.constant 0 : i32
    return %c0_i32, %c0_i32_0 : i32, i32
  }
  func.func @transform_2(%arg0: i32) -> (i32, i32) {
    %c0_i32 = arith.constant 0 : i32
    %c0_i32_0 = arith.constant 0 : i32
    return %c0_i32, %arg0 : i32, i32
  }
  func.func @transform_3(%arg0: i32) -> (i32, i32) {
    %c0_i32 = arith.constant 0 : i32
    %c0_i32_0 = arith.constant 0 : i32
    return %c0_i32, %arg0 : i32, i32
  }
}

</mosaic_0001>

<llo_original>
// kernel: model_forward.1
$region0: #{model_forward.1}
  #allocation0 [shape = 'u32[]', space=smem, size = 0x4, offset = 0x4, fixed_abs, tag = 'smem constant byte address 0x4 - core index']
  #allocation1 [shape = 'u32[144,128]{1,0:T(1,128)}', space=vmem, size = 0x12000, scoped, tag = 'internal scratch']
  %s0 = inlined_call_operand.vmem [shape: f32[6,24], index: 0, kind: input, shape index: {}]
  %s1 = inlined_call_operand.vmem [shape: f32[6,1], index: 1, kind: input, shape index: {}]
  %s2 = inlined_call_operand.vmem [shape: f32[12,8], index: 2, kind: input, shape index: {}]
  %s3 = inlined_call_operand.hbm [shape: f32[6,8], index: 3, kind: output, shape index: {}]
  %s4 = sld [smem:[#allocation0]]
  $region22: #{model_forward.1} parent=0
    _
  %s6 = ssub.s32 1, %s4
  %s7 = scalar_select 0, %s6, %s4
  $region1: #{model_forward.1} parent=0
    #allocation2 [shape = 'u8[4096]{0}', space=vmem, size = 0x1000, scoped, tag = 'output window, operand 0, single buffered']
    #allocation3 [shape = 's32[1]{0}', space=sflag, size = 0x4, scoped, tag = 'scoped memory for model_forward.1']
    %8 = vsyncpa [#allocation3], 0
    // Predicated region
    $region2: #{model_forward.1} parent=1 // pred_check
      _
    $region3: #{model_forward.1} parent=1 // pred_check_branch
      %10 = sbr.rel (0) target = $region5
    $region4: #{model_forward.1} parent=1 // pred_region
      _
    $region5: #{model_forward.1} parent=1 // pred_fallthru
      _
    // Predicated region
    $region6: #{model_forward.1} parent=1 // pred_check
      _
    $region7: #{model_forward.1} parent=1 // pred_check_branch
      %12 = sbr.rel (0) target = $region9
    $region8: #{model_forward.1} parent=1 // pred_region
      _
    $region9: #{model_forward.1} parent=1 // pred_fallthru
      _
    // Predicated region
    $region10: #{model_forward.1} parent=1 // pred_check
      _
    $region11: #{model_forward.1} parent=1 // pred_check_branch
      %14 = sbr.rel (0) target = $region13
    $region12: #{model_forward.1} parent=1 // pred_region
      _
    $region13: #{model_forward.1} parent=1 // pred_fallthru
      _
    %v15 = vld [vmem:[%s0] sm:$0x3f]
    %17 = vrot.lane.b32.xlu0 %v15, 116
    %v18 = vpop.permute.xlu0 %17
    %v20 = vadd.f32 %v15, %v18
    %v21 = vld [vmem:[%s2] sm:$0xff]
    %v22 = vld [vmem:[%s2 + $0x8] sm:$0xf]
    %24 = vset.pattern.permute.xlu0 0
    %25 = vperm.xlu0 %24, %v20
    %v26 = vpop.permute.xlu0 %25
    %v28 = vlaneseq
    %v29 = vshrl.u32 %v28, 7
    %v30 = vsub.s32 0, %v29
    %v31 = vrot.slane %v21, %v30
    %v32 = vmul.f32 %v26, %v31
    %v33 = vld [vmem:[%s1] sm:$0x3f]
    %35 = vset.pattern.permute.xlu0 0
    %36 = vperm.xlu0 %35, %v33
    %v37 = vpop.permute.xlu0 %36
    %v39 = vadd.f32 %v32, %v37
    %40 = vset.pattern.permute.xlu0 1
    %41 = vperm.xlu0 %40, %v20
    %v42 = vpop.permute.xlu0 %41
    %v44 = vlaneseq
    %v45 = vshrl.u32 %v44, 7
    %v46 = vsub.s32 1, %v45
    %v47 = vrot.slane %v21, %v46
    %v48 = vmul.f32 %v42, %v47
    %v49 = vadd.f32 %v39, %v48
    %50 = vset.pattern.permute.xlu0 2
    %51 = vperm.xlu0 %50, %v20
    %v52 = vpop.permute.xlu0 %51
    %v54 = vlaneseq
    %v55 = vshrl.u32 %v54, 7
    %v56 = vsub.s32 2, %v55
    %v57 = vrot.slane %v21, %v56
    %v58 = vmul.f32 %v52, %v57
    %v59 = vadd.f32 %v49, %v58
    %60 = vset.pattern.permute.xlu0 3
    %61 = vperm.xlu0 %60, %v20
    %v62 = vpop.permute.xlu0 %61
    %v64 = vlaneseq
    %v65 = vshrl.u32 %v64, 7
    %v66 = vsub.s32 3, %v65
    %v67 = vrot.slane %v21, %v66
    %v68 = vmul.f32 %v62, %v67
    %v69 = vadd.f32 %v59, %v68
    %70 = vset.pattern.permute.xlu0 4
    %71 = vperm.xlu0 %70, %v20
    %v72 = vpop.permute.xlu0 %71
    %v74 = vlaneseq
    %v75 = vshrl.u32 %v74, 7
    %v76 = vsub.s32 4, %v75
    %v77 = vrot.slane %v21, %v76
    %v78 = vmul.f32 %v72, %v77
    %v79 = vadd.f32 %v69, %v78
    %80 = vset.pattern.permute.xlu0 5
    %81 = vperm.xlu0 %80, %v20
    %v82 = vpop.permute.xlu0 %81
    %v84 = vlaneseq
    %v85 = vshrl.u32 %v84, 7
    %v86 = vsub.s32 5, %v85
    %v87 = vrot.slane %v21, %v86
    %v88 = vmul.f32 %v82, %v87
    %v89 = vadd.f32 %v79, %v88
    %90 = vset.pattern.permute.xlu0 6
    %91 = vperm.xlu0 %90, %v20
    %v92 = vpop.permute.xlu0 %91
    %v94 = vlaneseq
    %v95 = vshrl.u32 %v94, 7
    %v96 = vsub.s32 6, %v95
    %v97 = vrot.slane %v21, %v96
    %v98 = vmul.f32 %v92, %v97
    %v99 = vadd.f32 %v89, %v98
    %100 = vset.pattern.permute.xlu0 7
    %101 = vperm.xlu0 %100, %v20
    %v102 = vpop.permute.xlu0 %101
    %v104 = vlaneseq
    %v105 = vshrl.u32 %v104, 7
    %v106 = vsub.s32 7, %v105
    %v107 = vrot.slane %v21, %v106
    %v108 = vmul.f32 %v102, %v107
    %v109 = vadd.f32 %v99, %v108
    %110 = vset.pattern.permute.xlu0 8
    %111 = vperm.xlu0 %110, %v20
    %v112 = vpop.permute.xlu0 %111
    %v114 = vlaneseq
    %v115 = vshrl.u32 %v114, 7
    %v116 = vsub.s32 0, %v115
    %v117 = vrot.slane %v22, %v116
    %v118 = vmul.f32 %v112, %v117
    %v119 = vadd.f32 %v109, %v118
    %120 = vset.pattern.permute.xlu0 9
    %121 = vperm.xlu0 %120, %v20
    %v122 = vpop.permute.xlu0 %121
    %v124 = vlaneseq
    %v125 = vshrl.u32 %v124, 7
    %v126 = vsub.s32 1, %v125
    %v127 = vrot.slane %v22, %v126
    %v128 = vmul.f32 %v122, %v127
    %v129 = vadd.f32 %v119, %v128
    %130 = vset.pattern.permute.xlu0 10
    %131 = vperm.xlu0 %130, %v20
    %v132 = vpop.permute.xlu0 %131
    %v134 = vlaneseq
    %v135 = vshrl.u32 %v134, 7
    %v136 = vsub.s32 2, %v135
    %v137 = vrot.slane %v22, %v136
    %v138 = vmul.f32 %v132, %v137
    %v139 = vadd.f32 %v129, %v138
    %140 = vset.pattern.permute.xlu0 11
    %141 = vperm.xlu0 %140, %v20
    %v142 = vpop.permute.xlu0 %141
    %v144 = vlaneseq
    %v145 = vshrl.u32 %v144, 7
    %v146 = vsub.s32 3, %v145
    %v147 = vrot.slane %v22, %v146
    %v148 = vmul.f32 %v142, %v147
    %v149 = vadd.f32 %v139, %v148
    %vm150 = vcmask 62464
    %151 = vst.msk [vmem:[#allocation2] sm:$0x3f] %vm150, %v149
    // Predicated region
    $region14: #{model_forward.1} parent=1 // pred_check
      _
    $region15: #{model_forward.1} parent=1 // pred_check_branch
      %153 = sbr.rel (0) target = $region17
    $region16: #{model_forward.1} parent=1 // pred_region
      %s155 = ssub.s32 128, 128
      %156 = vsyncadd [#allocation3], %s155
      %s158 = sshll.u32 [#allocation2], 4
      %s159 = int_to_ptr.vmem [resolvable:$true] %s158
      %161 = dma.vmem_to_hbm [thread:$0]  %s159, 128, %s3, [#allocation3]
    $region17: #{model_forward.1} parent=1 // pred_fallthru
      _
    // Predicated region
    $region18: #{model_forward.1} parent=1 // pred_check
      _
    $region19: #{model_forward.1} parent=1 // pred_check_branch
      %163 = sbr.rel (0) target = $region21
    $region20: #{model_forward.1} parent=1 // pred_region
      %164 = dma.done [#allocation3], 128
    $region21: #{model_forward.1} parent=1 // pred_fallthru
      _
    %165 = vsyncpa [#allocation3], 1

</llo_original>
